<compile_context>
chip_gen: v7x
topology: tpu7x:2x2x1
jax: 0.10.0
libtpu: 0.0.40
codegen_flags: <defaults>
</compile_context>

<pallas_src>
import functools

import jax
import jax.numpy as jnp
from jax.experimental import pallas as pl
from jax.experimental.pallas import tpu as pltpu

PAD = 0


def _round_up(x, m):
    return ((x + m - 1) // m) * m


def _vmem_limit_bytes():
    # ~75% of physical VMEM (v5e/v6e: 128 MiB -> 96 MiB, v7x: 64 MiB -> 48 MiB),
    # leaving headroom for compiler-internal scratch / double-buffering.
    try:
        cap = pltpu.get_tpu_info().vmem_capacity_bytes
    except Exception:
        cap = 64 * 1024 * 1024
    return int(cap) * 3 // 4


def _pick_row_tile(m, d, n, budget_bytes):
    """Largest row tile dividing m whose double-buffered bf16 blocks fit the budget."""
    for tm in (4096, 2048, 1024, 512, 256, 128, 64, 32, 16, 8):
        if m % tm:
            continue
        need = 2 * (tm * d + tm * n + d * n) * 2      # bf16, double buffered
        if need <= budget_bytes:
            return tm
    return m


# --------------------- kernel 1: hoisted fused input projection --------------
def _proj_kernel(x_ref, w_ref, b_ref, o_ref):
    # x: (tm, D) bf16 ; w: (D, 6Hp) bf16 (both directions fused) ; b: (1, 6Hp) f32
    acc = jnp.dot(x_ref[...], w_ref[...], preferred_element_type=jnp.float32)
    o_ref[...] = (acc + b_ref[...]).astype(o_ref.dtype)


def input_projection(xs_e_flat, wx, b, vmem_limit):
    """gx = xs_e @ [Wx_f | Wx_b] + [b_f | b_b].  Returns (M, 6Hp) bf16."""
    M, D = xs_e_flat.shape
    N = wx.shape[1]
    tm = _pick_row_tile(M, D, N, vmem_limit // 2)
    return pl.pallas_call(
        _proj_kernel,
        out_shape=jax.ShapeDtypeStruct((M, N), jnp.bfloat16),
        grid_spec=pltpu.PrefetchScalarGridSpec(
            num_scalar_prefetch=0,
            grid=(M // tm,),
            in_specs=[
                pl.BlockSpec((tm, D), lambda i: (i, 0)),      # activations (bf16)
                pl.BlockSpec((D, N), lambda i: (0, 0)),       # fused Wx (z|r|h)x2
                pl.BlockSpec((1, N), lambda i: (0, 0)),       # fused bias (f32)
            ],
            out_specs=pl.BlockSpec((tm, N), lambda i: (i, 0)),
        ),
        compiler_params=pltpu.CompilerParams(
            dimension_semantics=("parallel",),
            vmem_limit_bytes=vmem_limit),
    )(xs_e_flat, wx, b)


# ------------- kernel 2: interleaved bidirectional GRU recurrent scan --------
def _bigru_scan_kernel(gxf_ref, gxb_ref, mf_ref, mb_ref, whzr_ref, whh_ref,
                       right_ref, left_ref, hf_ref, hb_ref, *, t_block, hp):
    tb = pl.program_id(0)

    @pl.when(tb == 0)
    def _():
        hf_ref[...] = jnp.zeros_like(hf_ref)      # h0 = zeros, per direction
        hb_ref[...] = jnp.zeros_like(hb_ref)

    # Recurrent weights (bf16), hoisted out of the unrolled loop.
    # TODO(synk): stage these in the MXU across timesteps (matmul_push_rhs).
    whzr_f = whzr_ref[0]          # (Hp, 2Hp)  gates z|r, forward
    whzr_b = whzr_ref[1]
    whh_f = whh_ref[0]            # (Hp, Hp)   candidate, forward
    whh_b = whh_ref[1]

    def gru_step(gx, m, h, whzr, whh):
        # gx: (B, 3Hp) f32 (bias folded), m: (B, Hp) f32, h: (B, Hp) f32 carry
        gh = jnp.dot(h.astype(whzr.dtype), whzr,
                     preferred_element_type=jnp.float32)          # (B, 2Hp)
        z = jax.nn.sigmoid(gx[:, :hp] + gh[:, :hp])
        r = jax.nn.sigmoid(gx[:, hp:2 * hp] + gh[:, hp:])
        c = jnp.tanh(gx[:, 2 * hp:]
                     + jnp.dot((r * h).astype(whh.dtype), whh,
                               preferred_element_type=jnp.float32))
        h_new = (1.0 - z) * h + z * c
        return m * h_new + (1.0 - m) * h          # hold state on padding

    def step(t, carry):
        # Forward chain: ascending inside its time block (block index tb).
        h_f = gru_step(gxf_ref[t].astype(jnp.float32),
                       mf_ref[t].astype(jnp.float32),
                       hf_ref[...], whzr_f, whh_f)
        hf_ref[...] = h_f
        right_ref[t] = h_f.astype(right_ref.dtype)

        # Backward chain: descending inside its mirrored block (nb-1-tb).
        tt = t_block - 1 - t
        h_b = gru_step(gxb_ref[tt].astype(jnp.float32),
                       mb_ref[tt].astype(jnp.float32),
                       hb_ref[...], whzr_b, whh_b)
        hb_ref[...] = h_b
        left_ref[tt] = h_b.astype(left_ref.dtype)
        return carry

    jax.lax.fori_loop(0, t_block, step, 0, unroll=True)


def bigru_scan(gx, mask, whzr_st, whh_st, *, t_block, hp, vmem_limit):
    """gx: (Lp, Bp, 6Hp) bf16 fused gates; returns (right, left), each (Lp, Bp, Hp) bf16."""
    Lp, Bp, _ = gx.shape
    nb = Lp // t_block

    kernel = functools.partial(_bigru_scan_kernel, t_block=t_block, hp=hp)
    out_sds = jax.ShapeDtypeStruct((Lp, Bp, hp), jnp.bfloat16)
    return pl.pallas_call(
        kernel,
        out_shape=(out_sds, out_sds),
        grid_spec=pltpu.PrefetchScalarGridSpec(
            num_scalar_prefetch=0,
            grid=(nb,),
            in_specs=[
                # gx forward gates: channel block 0 ([0:3Hp]) at time block tb.
                pl.BlockSpec((t_block, Bp, 3 * hp), lambda tb: (tb, 0, 0)),
                # gx backward gates: channel block 1 ([3Hp:6Hp]) at nb-1-tb.
                pl.BlockSpec((t_block, Bp, 3 * hp), lambda tb: (nb - 1 - tb, 0, 1)),
                # Lane-pre-broadcast mask for each chain's time block.
                pl.BlockSpec((t_block, Bp, hp), lambda tb: (tb, 0, 0)),
                pl.BlockSpec((t_block, Bp, hp), lambda tb: (nb - 1 - tb, 0, 0)),
                pl.BlockSpec((2, hp, 2 * hp), lambda tb: (0, 0, 0)),   # Whzr f/b
                pl.BlockSpec((2, hp, hp), lambda tb: (0, 0, 0)),       # Whh  f/b
            ],
            out_specs=(
                pl.BlockSpec((t_block, Bp, hp), lambda tb: (tb, 0, 0)),           # right
                pl.BlockSpec((t_block, Bp, hp), lambda tb: (nb - 1 - tb, 0, 0)),  # left
            ),
            scratch_shapes=[pltpu.VMEM((Bp, hp), jnp.float32),    # h carry, forward
                            pltpu.VMEM((Bp, hp), jnp.float32)],   # h carry, backward
        ),
        compiler_params=pltpu.CompilerParams(
            dimension_semantics=("arbitrary",),
            vmem_limit_bytes=vmem_limit),
    )(gx, gx, mask, mask, whzr_st, whh_st)


# ----------------------- parameter prep (gate padding) -----------------------
def _pad_gates(w, h, hp, n_gates, axis):
    """Re-pad a gate-concatenated axis from n_gates*h to n_gates*hp (zero fill)."""
    parts = jnp.split(w, n_gates, axis=axis)
    pads = [(0, 0)] * w.ndim
    pads[axis] = (0, hp - h)
    return jnp.concatenate([jnp.pad(p, pads) for p in parts], axis=axis)


def _prep_direction(wx, whzr, whh, b, hp):
    h = whh.shape[0]
    wx_p = _pad_gates(wx, h, hp, 3, axis=1)                    # (D, 3Hp)
    b_p = _pad_gates(b.reshape(1, -1), h, hp, 3, axis=1)       # (1, 3Hp)
    whzr_p = jnp.pad(whzr, ((0, hp - h), (0, 0)))
    whzr_p = _pad_gates(whzr_p, h, hp, 2, axis=1)              # (Hp, 2Hp)
    whh_p = jnp.pad(whh, ((0, hp - h), (0, hp - h)))           # (Hp, Hp)
    return wx_p, whzr_p, whh_p, b_p


# --------------------------------- encoder -----------------------------------
def encoder_forward(params, xs, xs_mask=None, *, t_block=None):
    """Equivalent of Encoder.forward.  xs: (L, B) int tokens (time-major)."""
    L, B = xs.shape
    emb = params["emb"]
    D = emb.shape[1]
    H = params["forw"][2].shape[0]              # Whh is (H, H)
    Hp = _round_up(H, 128)
    if t_block is None:
        # Larger time blocks amortize per-grid-step overhead for long L; no
        # point padding tiny sequences past their length.
        t_block = max(8, min(32, _round_up(L, 8)))
    Lp = _round_up(L, t_block)
    Bp = _round_up(B, 8)
    vmem_limit = _vmem_limit_bytes()

    if xs_mask is None:
        xs_mask = jnp.ones((L, B), jnp.float32)

    # Glue (XLA): bf16 embedding gather + padding + lane-broadcast bf16 mask.
    xs_e = jnp.take(emb.astype(jnp.bfloat16), xs, axis=0)               # (L, B, D) bf16
    xs_e = jnp.pad(xs_e, ((0, Lp - L), (0, Bp - B), (0, 0)))
    mask = jnp.pad(xs_mask.astype(jnp.float32),
                   ((0, Lp - L), (0, Bp - B)))                          # (Lp, Bp)
    mask = jnp.broadcast_to(mask[..., None], (Lp, Bp, Hp)).astype(jnp.bfloat16)

    # Weights: gate-block padded to Hp; both directions fused along the Wx
    # output axis (single activation pass); recurrent weights stacked; bf16.
    wx_f, whzr_f, whh_f, b_f = _prep_direction(*params["forw"], hp=Hp)
    wx_b, whzr_b, whh_b, b_b = _prep_direction(*params["back"], hp=Hp)
    wx = jnp.concatenate([wx_f, wx_b], axis=1).astype(jnp.bfloat16)     # (D, 6Hp)
    b = jnp.concatenate([b_f, b_b], axis=1).astype(jnp.float32)         # (1, 6Hp)
    whzr_st = jnp.stack([whzr_f, whzr_b]).astype(jnp.bfloat16)          # (2, Hp, 2Hp)
    whh_st = jnp.stack([whh_f, whh_b]).astype(jnp.bfloat16)             # (2, Hp, Hp)

    # Kernel 1: hoisted fused input projection (activations read once, bias folded).
    gx = input_projection(xs_e.reshape(Lp * Bp, D), wx, b, vmem_limit)  # (Lp*Bp, 6Hp)
    gx = gx.reshape(Lp, Bp, 6 * Hp)

    # Kernel 2: interleaved bidirectional recurrent scan (bf16 outputs).
    right, left = bigru_scan(gx, mask, whzr_st, whh_st,
                             t_block=t_block, hp=Hp, vmem_limit=vmem_limit)

    # Glue (XLA): de-pad + concat (mirrors the PyTorch cat([right, left], -1)).
    r1 = jnp.concatenate([right[:L, :B, :H], left[:L, :B, :H]], axis=-1)
    r2 = left[0, :B, :H]
    return r1, r2


# ---------------- pure-JAX reference for correctness check ------------------
def _gru_ref(xs_e, xs_mask, wx, whzr, whh, b, reverse=False):
    H = whh.shape[0]

    def step(h, inp):
        x, m = inp
        gx = x @ wx
        gh = h @ whzr
        z = jax.nn.sigmoid(gx[:, :H] + gh[:, :H] + b[:H])
        r = jax.nn.sigmoid(gx[:, H:2 * H] + gh[:, H:2 * H] + b[H:2 * H])
        c = jnp.tanh(gx[:, 2 * H:] + (r * h) @ whh + b[2 * H:])
        h_new = (1 - z) * h + z * c
        h_new = m[:, None] * h_new + (1 - m[:, None]) * h
        return h_new, h_new

    h0 = jnp.zeros((xs_e.shape[1], H), jnp.float32)
    _, ys = jax.lax.scan(step, h0, (xs_e, xs_mask), reverse=reverse)
    return ys


def _encoder_ref(params, xs, xs_mask):
    xs_e = params["emb"][xs]
    right = _gru_ref(xs_e, xs_mask, *params["forw"], reverse=False)
    left = _gru_ref(xs_e, xs_mask, *params["back"], reverse=True)
    return jnp.concatenate([right, left], axis=-1), left[0]


if __name__ == "__main__":
    # src_vocab_size=16, src_wemb_size=input_size=32, output_size=32, L=8, B=8.
    VOCAB, D, H, L, B = 16, 32, 32, 8, 8

    key = jax.random.PRNGKey(0)
    ks = jax.random.split(key, 10)

    def init_gru(k0, k1, k2, k3):
        wx = 0.1 * jax.random.normal(k0, (D, 3 * H), jnp.float32)
        whzr = 0.1 * jax.random.normal(k1, (H, 2 * H), jnp.float32)
        whh = 0.1 * jax.random.normal(k2, (H, H), jnp.float32)
        b = 0.1 * jax.random.normal(k3, (3 * H,), jnp.float32)
        return (wx, whzr, whh, b)

    emb = 0.1 * jax.random.normal(ks[0], (VOCAB, D), jnp.float32)
    emb = emb.at[PAD].set(0.0)                     # padding_idx=PAD -> zero row

    params = {
        "emb": emb,
        "forw": init_gru(ks[1], ks[2], ks[3], ks[4]),
        "back": init_gru(ks[5], ks[6], ks[7], ks[8]),
    }

    # Token ids (L, B) with variable-length sequences; PAD past the length.
    lengths = jnp.array([8, 8, 7, 6, 8, 5, 8, 4], dtype=jnp.int32)
    xs = jax.random.randint(ks[9], (L, B), 1, VOCAB, dtype=jnp.int32)
    tpos = jnp.arange(L)[:, None]
    xs_mask = (tpos < lengths[None, :]).astype(jnp.float32)     # (L, B)
    xs = jnp.where(xs_mask > 0, xs, PAD).astype(jnp.int32)

    r1, r2 = encoder_forward(params, xs, xs_mask)
    jax.block_until_ready((r1, r2))

    r1_ref, r2_ref = _encoder_ref(params, xs, xs_mask)
    assert r1.shape == (L, B, 2 * H) and r2.shape == (B, H)
    # Kernels use bf16 weights / gx / outputs (f32 carry & accumulation) ->
    # loosened tolerance vs the all-f32 lax.scan reference.
    assert jnp.allclose(r1, r1_ref, atol=2e-2, rtol=2e-2), \
        float(jnp.max(jnp.abs(r1.astype(jnp.float32) - r1_ref)))
    assert jnp.allclose(r2, r2_ref, atol=2e-2, rtol=2e-2), \
        float(jnp.max(jnp.abs(r2.astype(jnp.float32) - r2_ref)))

    print("KERNEL_OK")
</pallas_src>

<mosaic_0001>
module attributes {stable_mosaic.version = 11 : i64} {
  func.func @_proj_kernel(%arg0: i32, %arg1: memref<64x32xbf16, #tpu.memory_space<vmem>>, %arg2: memref<32x768xbf16, #tpu.memory_space<vmem>>, %arg3: memref<1x768xf32, #tpu.memory_space<vmem>>, %arg4: memref<64x768xbf16, #tpu.memory_space<vmem>>) attributes {dimension_semantics = [#tpu.dimension_semantics<parallel>], iteration_bounds = array<i64: 1>, scalar_prefetch = 0 : i64, scratch_operands = 0 : i64, tpu.core_type = #tpu.core_type<tc>, window_params = [{transform_indices = @transform_0, window_bounds = array<i64: 64, 32>}, {pipeline_mode = #tpu.pipeline_mode<synchronous>, transform_indices = @transform_1, window_bounds = array<i64: 32, 768>}, {pipeline_mode = #tpu.pipeline_mode<synchronous>, transform_indices = @transform_2, window_bounds = array<i64: 1, 768>}, {transform_indices = @transform_3, window_bounds = array<i64: 64, 768>}]} {
    %c0 = arith.constant 0 : index
    %c0_0 = arith.constant 0 : index
    %0 = vector.load %arg1[%c0, %c0_0] : memref<64x32xbf16, #tpu.memory_space<vmem>>, vector<64x32xbf16>
    %c0_1 = arith.constant 0 : index
    %c0_2 = arith.constant 0 : index
    %1 = vector.load %arg2[%c0_1, %c0_2] : memref<32x768xbf16, #tpu.memory_space<vmem>>, vector<32x768xbf16>
    %cst = arith.constant dense<0.000000e+00> : vector<64x768xf32>
    %2 = tpu.matmul %0, %1, %cst {dimension_numbers = #tpu.dot_dimension_numbers<[1], [0], [0], [1], [0, 0, 1, 1], [], []>} : vector<64x32xbf16>, vector<32x768xbf16>, vector<64x768xf32> -> vector<64x768xf32>
    %c0_3 = arith.constant 0 : index
    %c0_4 = arith.constant 0 : index
    %3 = vector.load %arg3[%c0_3, %c0_4] : memref<1x768xf32, #tpu.memory_space<vmem>>, vector<1x768xf32>
    %4 = vector.broadcast %3 : vector<1x768xf32> to vector<64x768xf32>
    %5 = arith.addf %2, %4 : vector<64x768xf32>
    %6 = arith.truncf %5 : vector<64x768xf32> to vector<64x768xbf16>
    %c0_5 = arith.constant 0 : index
    %c0_6 = arith.constant 0 : index
    %7 = vector.load %arg4[%c0_5, %c0_6] : memref<64x768xbf16, #tpu.memory_space<vmem>>, vector<64x768xbf16>
    tpu.vector_store %arg4[%c0_5, %c0_6], %6 {strides = array<i32>} : memref<64x768xbf16, #tpu.memory_space<vmem>>, vector<64x768xbf16>,
    return
  }
  func.func @transform_0(%arg0: i32) -> (i32, i32) {
    %c0_i32 = arith.constant 0 : i32
    %c0_i32_0 = arith.constant 0 : i32
    return %arg0, %c0_i32 : i32, i32
  }
  func.func @transform_1(%arg0: i32) -> (i32, i32) {
    %c0_i32 = arith.constant 0 : i32
    %c0_i32_0 = arith.constant 0 : i32
    %c0_i32_1 = arith.constant 0 : i32
    return %c0_i32, %c0_i32_0 : i32, i32
  }
  func.func @transform_2(%arg0: i32) -> (i32, i32) {
    %c0_i32 = arith.constant 0 : i32
    %c0_i32_0 = arith.constant 0 : i32
    %c0_i32_1 = arith.constant 0 : i32
    return %c0_i32, %c0_i32_0 : i32, i32
  }
  func.func @transform_3(%arg0: i32) -> (i32, i32) {
    %c0_i32 = arith.constant 0 : i32
    %c0_i32_0 = arith.constant 0 : i32
    return %arg0, %c0_i32 : i32, i32
  }
}

</mosaic_0001>

<llo_original>
// kernel: tpu_custom_call.1
$region0: #{tpu_custom_call.1}
  #allocation0 [shape = 'u32[]', space=smem, size = 0x4, offset = 0x4, fixed_abs, tag = 'smem constant byte address 0x4 - core index']
  #allocation1 [shape = 'u32[144,128]{1,0:T(1,128)}', space=vmem, size = 0x12000, scoped, tag = 'internal scratch']
  %s0 = inlined_call_operand.vmem [shape: bf16[64,32], index: 0, kind: input, shape index: {}]
  %s1 = inlined_call_operand.hbm [shape: bf16[32,768], index: 1, kind: input, shape index: {}]
  %s2 = inlined_call_operand.vmem [shape: f32[1,768], index: 2, kind: input, shape index: {}]
  %s3 = inlined_call_operand.hbm [shape: bf16[64,768], index: 3, kind: output, shape index: {}]
  %s4 = sld [smem:[#allocation0]]
  $region26: #{tpu_custom_call.1} parent=0
    _
  %s6 = ssub.s32 1, %s4
  %s7 = scalar_select 0, %s6, %s4
  $region1: #{tpu_custom_call.1} parent=0
    #allocation2 [shape = 'u8[49152]{0}', space=vmem, size = 0xc000, scoped, tag = 'input window, operand 1, single buffered']
    #allocation3 [shape = 's32[1]{0}', space=sflag, size = 0x4, scoped, tag = 'scoped memory for tpu_custom_call.1']
    #allocation4 [shape = 's32[1]{0}', space=sflag, size = 0x4, scoped, tag = 'scoped memory for tpu_custom_call.1']
    #allocation5 [shape = 'u8[98304]{0}', space=vmem, size = 0x18000, scoped, tag = 'output window, operand 0, single buffered']
    %8 = vsyncpa [#allocation3], 0
    %9 = vsyncpa [#allocation4], 0
    // Predicated region
    $region2: #{tpu_custom_call.1} parent=1 // pred_check
      _
    $region3: #{tpu_custom_call.1} parent=1 // pred_check_branch
      %11 = sbr.rel (0) target = $region5
    $region4: #{tpu_custom_call.1} parent=1 // pred_region
      _
    $region5: #{tpu_custom_call.1} parent=1 // pred_fallthru
      _
    // Predicated region
    $region6: #{tpu_custom_call.1} parent=1 // pred_check
      _
    $region7: #{tpu_custom_call.1} parent=1 // pred_check_branch
      %13 = sbr.rel (0) target = $region9
    $region8: #{tpu_custom_call.1} parent=1 // pred_region
      %s15 = ssub.s32 1536, 1536
      %16 = vsyncadd [#allocation3], %s15
      %s17 = sshll.u32 [#allocation2], 4
      %s18 = int_to_ptr.vmem [resolvable:$true] %s17
      %23 = dma.hbm_to_vmem [thread:$0]  %s1, 1536, %s18, [#allocation3], 384, 384, 24
    $region9: #{tpu_custom_call.1} parent=1 // pred_fallthru
      _
    // Predicated region
    $region10: #{tpu_custom_call.1} parent=1 // pred_check
      _
    $region11: #{tpu_custom_call.1} parent=1 // pred_check_branch
      %25 = sbr.rel (0) target = $region13
    $region12: #{tpu_custom_call.1} parent=1 // pred_region
      _
    $region13: #{tpu_custom_call.1} parent=1 // pred_fallthru
      _
    // Predicated region
    $region14: #{tpu_custom_call.1} parent=1 // pred_check
      _
    $region15: #{tpu_custom_call.1} parent=1 // pred_check_branch
      %27 = sbr.rel (0) target = $region17
    $region16: #{tpu_custom_call.1} parent=1 // pred_region
      %28 = dma.done [#allocation3], 1536
    $region17: #{tpu_custom_call.1} parent=1 // pred_fallthru
      _
    %v30 = vld [vmem:[%s0] sm:$0xf]
    %v31 = vld [vmem:[%s0 + $0x4] sm:$0xf]
    %v32 = vld [vmem:[%s0 + $0x8] sm:$0xf]
    %v33 = vld [vmem:[%s0 + $0xc] sm:$0xf]
    %v34 = vld [vmem:[%s0 + $0x10] sm:$0xf]
    %v35 = vld [vmem:[%s0 + $0x14] sm:$0xf]
    %v36 = vld [vmem:[%s0 + $0x18] sm:$0xf]
    %v37 = vld [vmem:[%s0 + $0x1c] sm:$0xf]
    %v38 = vld [vmem:[#allocation2] sm:$0xff]
    %v39 = vld [vmem:[#allocation2 + $0x8] sm:$0xff]
    %v40 = vld [vmem:[#allocation2 + $0x10] sm:$0xff]
    %v41 = vld [vmem:[#allocation2 + $0x18] sm:$0xff]
    %v42 = vld [vmem:[#allocation2 + $0x20] sm:$0xff]
    %v43 = vld [vmem:[#allocation2 + $0x28] sm:$0xff]
    %v44 = vld [vmem:[#allocation2 + $0x30] sm:$0xff]
    %v45 = vld [vmem:[#allocation2 + $0x38] sm:$0xff]
    %v46 = vld [vmem:[#allocation2 + $0x40] sm:$0xff]
    %v47 = vld [vmem:[#allocation2 + $0x48] sm:$0xff]
    %v48 = vld [vmem:[#allocation2 + $0x50] sm:$0xff]
    %v49 = vld [vmem:[#allocation2 + $0x58] sm:$0xff]
    %v50 = vld [vmem:[%s2] sm:$0x3f]
    %v52 = vlaneseq
    %v53 = vshrl.u32 %v52, 7
    %v54 = vsub.s32 0, %v53
    %v55 = vrot.slane %v50, %v54
    %v56 = vlaneseq
    %v57 = vshrl.u32 %v56, 7
    %v58 = vsub.s32 1, %v57
    %v59 = vrot.slane %v50, %v58
    %v60 = vlaneseq
    %v61 = vshrl.u32 %v60, 7
    %v62 = vsub.s32 2, %v61
    %v63 = vrot.slane %v50, %v62
    %v64 = vlaneseq
    %v65 = vshrl.u32 %v64, 7
    %v66 = vsub.s32 3, %v65
    %v67 = vrot.slane %v50, %v66
    %v68 = vlaneseq
    %v69 = vshrl.u32 %v68, 7
    %v70 = vsub.s32 4, %v69
    %v71 = vrot.slane %v50, %v70
    %v72 = vlaneseq
    %v73 = vshrl.u32 %v72, 7
    %v74 = vsub.s32 5, %v73
    %v75 = vrot.slane %v50, %v74
    %v90 = vunpack.c.l.b16 %v30
    %v91 = vunpack.c.l.b16 %v31
    %v92 = vunpack.c.l.b16 %v32
    %v93 = vunpack.c.l.b16 %v33
    %v94 = vunpack.c.l.b16 %v34
    %v95 = vunpack.c.l.b16 %v35
    %v96 = vunpack.c.l.b16 %v36
    %v97 = vunpack.c.l.b16 %v37
    %v98 = vpack.c.b16 %v91, %v90
    %v99 = vpack.c.b16 %v93, %v92
    %v100 = vpack.c.b16 %v95, %v94
    %v101 = vpack.c.b16 %v97, %v96
    %v114 = vunpack.c.l.b16 %v38
    %v115 = vunpack.c.h.b16 %v38
    %v116 = vunpack.c.l.b16 %v39
    %v117 = vunpack.c.h.b16 %v39
    %v118 = vunpack.c.l.b16 %v40
    %v119 = vunpack.c.h.b16 %v40
    %v120 = vunpack.c.l.b16 %v41
    %v121 = vunpack.c.h.b16 %v41
    %v122 = vunpack.c.l.b16 %v42
    %v123 = vunpack.c.h.b16 %v42
    %v124 = vunpack.c.l.b16 %v43
    %v125 = vunpack.c.h.b16 %v43
    %v126 = vunpack.c.l.b16 %v44
    %v127 = vunpack.c.h.b16 %v44
    %v128 = vunpack.c.l.b16 %v45
    %v129 = vunpack.c.h.b16 %v45
    %v130 = vunpack.c.l.b16 %v46
    %v131 = vunpack.c.h.b16 %v46
    %v132 = vunpack.c.l.b16 %v47
    %v133 = vunpack.c.h.b16 %v47
    %v134 = vunpack.c.l.b16 %v48
    %v135 = vunpack.c.h.b16 %v48
    %v136 = vunpack.c.l.b16 %v49
    %v137 = vunpack.c.h.b16 %v49
    %v138 = vpack.c.b16 %v120, %v114
    %v139 = vpack.c.b16 %v121, %v115
    %v140 = vpack.c.b16 %v122, %v116
    %v141 = vpack.c.b16 %v123, %v117
    %v142 = vpack.c.b16 %v124, %v118
    %v143 = vpack.c.b16 %v125, %v119
    %v144 = vpack.c.b16 %v132, %v126
    %v145 = vpack.c.b16 %v133, %v127
    %v146 = vpack.c.b16 %v134, %v128
    %v147 = vpack.c.b16 %v135, %v129
    %v148 = vpack.c.b16 %v136, %v130
    %v149 = vpack.c.b16 %v137, %v131
    %vm162 = vcmask 261120
    %v164 = vsel %vm162, %v98, 0
    %v167 = vsel %vm162, %v99, 0
    %v170 = vsel %vm162, %v100, 0
    %v173 = vsel %vm162, %v101, 0
    %175 = vmatprep.subr.bf16.mxu0 %v139
    %176 = vmatpush1.bf16.msra.mxu0 %v138
    %177 = vmatprep.subr.bf16.mxu0 %v145
    %178 = vmatpush1.bf16.msra.mxu0 %v144
    %179 = vmatprep.subr.bf16.mxu0 0
    %180 = vmatpush1.bf16.msra.mxu0 0
    %181 = vmatprep.subr.bf16.mxu0 0
    %182 = vmatpush1.bf16.msra.mxu0 0
    %183 = vmatprep.subr.bf16.mxu0 0
    %184 = vmatpush1.bf16.msra.mxu0 0
    %185 = vmatprep.subr.bf16.mxu0 0
    %186 = vmatpush1.bf16.msra.mxu0 0
    %187 = vmatprep.subr.bf16.mxu0 0
    %188 = vmatpush1.bf16.msra.mxu0 0
    %189 = vmatprep.subr.bf16.mxu0 0
    %190 = vmatpush1.bf16.msra.mxu0 0
    %191 = vmatprep.subr.bf16.mxu0 0
    %192 = vmatpush1.bf16.msra.mxu0 0
    %193 = vmatprep.subr.bf16.mxu0 0
    %194 = vmatpush1.bf16.msra.mxu0 0
    %195 = vmatprep.subr.bf16.mxu0 0
    %196 = vmatpush1.bf16.msra.mxu0 0
    %197 = vmatprep.subr.bf16.mxu0 0
    %198 = vmatpush1.bf16.msra.mxu0 0
    %199 = vmatprep.subr.bf16.mxu0 0
    %200 = vmatpush1.bf16.msra.mxu0 0
    %201 = vmatprep.subr.bf16.mxu0 0
    %202 = vmatpush1.bf16.msra.mxu0 0
    %203 = vmatprep.subr.bf16.mxu0 0
    %204 = vmatpush1.bf16.msra.mxu0 0
    %205 = vmatprep.subr.bf16.mxu0 0
    %206 = vmatpush1.bf16.msra.mxu0 0
    %207 = vmatprep.mubr.bf16.mxu0 0
    %208 = vmatmul.mubr.bf16.gmra.mrb[0].mxu0 %v164
    %v209 = vpop.f32.mrb[0].mxu0
    %v210 = vadd.f32 %v55, %v209
    %v211 = vpop.f32.mrb[0].mxu0
    %v212 = vadd.f32 %v59, %v211
    %v213 = vpop.f32.mrb[0].mxu0
    %v214 = vadd.f32 %v55, %v213
    %v215 = vpop.f32.mrb[0].mxu0
    %v216 = vadd.f32 %v59, %v215
    %217 = vmatprep.mubr.bf16.mxu0 0
    %218 = vmatmul.mubr.bf16.gmra.mrb[0].mxu0 %v167
    %v219 = vpop.f32.mrb[0].mxu0
    %v220 = vadd.f32 %v55, %v219
    %v221 = vpop.f32.mrb[0].mxu0
    %v222 = vadd.f32 %v59, %v221
    %v223 = vpop.f32.mrb[0].mxu0
    %v224 = vadd.f32 %v55, %v223
    %v225 = vpop.f32.mrb[0].mxu0
    %v226 = vadd.f32 %v59, %v225
    %227 = vmatprep.mubr.bf16.mxu0 0
    %228 = vmatmul.mubr.bf16.gmra.mrb[0].mxu0 %v170
    %v229 = vpop.f32.mrb[0].mxu0
    %v230 = vadd.f32 %v55, %v229
    %v231 = vpop.f32.mrb[0].mxu0
    %v232 = vadd.f32 %v59, %v231
    %v233 = vpop.f32.mrb[0].mxu0
    %v234 = vadd.f32 %v55, %v233
    %v235 = vpop.f32.mrb[0].mxu0
    %v236 = vadd.f32 %v59, %v235
    %237 = vmatprep.mubr.bf16.mxu0 0
    %238 = vmatmul.mubr.bf16.gmra.mrb[0].mxu0 %v173
    %v239 = vpop.f32.mrb[0].mxu0
    %v240 = vadd.f32 %v55, %v239
    %v241 = vpop.f32.mrb[0].mxu0
    %v242 = vadd.f32 %v59, %v241
    %v243 = vpop.f32.mrb[0].mxu0
    %v244 = vadd.f32 %v55, %v243
    %v245 = vpop.f32.mrb[0].mxu0
    %v246 = vadd.f32 %v59, %v245
    %247 = vdwg.mxu0
    %248 = vmatprep.subr.bf16.mxu0 %v141
    %249 = vmatpush1.bf16.msra.mxu0 %v140
    %250 = vmatprep.subr.bf16.mxu0 %v147
    %251 = vmatpush1.bf16.msra.mxu0 %v146
    %252 = vmatprep.subr.bf16.mxu0 0
    %253 = vmatpush1.bf16.msra.mxu0 0
    %254 = vmatprep.subr.bf16.mxu0 0
    %255 = vmatpush1.bf16.msra.mxu0 0
    %256 = vmatprep.subr.bf16.mxu0 0
    %257 = vmatpush1.bf16.msra.mxu0 0
    %258 = vmatprep.subr.bf16.mxu0 0
    %259 = vmatpush1.bf16.msra.mxu0 0
    %260 = vmatprep.subr.bf16.mxu0 0
    %261 = vmatpush1.bf16.msra.mxu0 0
    %262 = vmatprep.subr.bf16.mxu0 0
    %263 = vmatpush1.bf16.msra.mxu0 0
    %264 = vmatprep.subr.bf16.mxu0 0
    %265 = vmatpush1.bf16.msra.mxu0 0
    %266 = vmatprep.subr.bf16.mxu0 0
    %267 = vmatpush1.bf16.msra.mxu0 0
    %268 = vmatprep.subr.bf16.mxu0 0
    %269 = vmatpush1.bf16.msra.mxu0 0
    %270 = vmatprep.subr.bf16.mxu0 0
    %271 = vmatpush1.bf16.msra.mxu0 0
    %272 = vmatprep.subr.bf16.mxu0 0
    %273 = vmatpush1.bf16.msra.mxu0 0
    %274 = vmatprep.subr.bf16.mxu0 0
    %275 = vmatpush1.bf16.msra.mxu0 0
    %276 = vmatprep.subr.bf16.mxu0 0
    %277 = vmatpush1.bf16.msra.mxu0 0
    %278 = vmatprep.subr.bf16.mxu0 0
    %279 = vmatpush1.bf16.msra.mxu0 0
    %280 = vmatprep.mubr.bf16.mxu0 0
    %281 = vmatmul.mubr.bf16.gmra.mrb[0].mxu0 %v164
    %v282 = vpop.f32.mrb[0].mxu0
    %v283 = vadd.f32 %v63, %v282
    %v284 = vpop.f32.mrb[0].mxu0
    %v285 = vadd.f32 %v67, %v284
    %v286 = vpop.f32.mrb[0].mxu0
    %v287 = vadd.f32 %v63, %v286
    %v288 = vpop.f32.mrb[0].mxu0
    %v289 = vadd.f32 %v67, %v288
    %290 = vmatprep.mubr.bf16.mxu0 0
    %291 = vmatmul.mubr.bf16.gmra.mrb[0].mxu0 %v167
    %v292 = vpop.f32.mrb[0].mxu0
    %v293 = vadd.f32 %v63, %v292
    %v294 = vpop.f32.mrb[0].mxu0
    %v295 = vadd.f32 %v67, %v294
    %v296 = vpop.f32.mrb[0].mxu0
    %v297 = vadd.f32 %v63, %v296
    %v298 = vpop.f32.mrb[0].mxu0
    %v299 = vadd.f32 %v67, %v298
    %300 = vmatprep.mubr.bf16.mxu0 0
    %301 = vmatmul.mubr.bf16.gmra.mrb[0].mxu0 %v170
    %v302 = vpop.f32.mrb[0].mxu0
    %v303 = vadd.f32 %v63, %v302
    %v304 = vpop.f32.mrb[0].mxu0
    %v305 = vadd.f32 %v67, %v304
    %v306 = vpop.f32.mrb[0].mxu0
    %v307 = vadd.f32 %v63, %v306
    %v308 = vpop.f32.mrb[0].mxu0
    %v309 = vadd.f32 %v67, %v308
    %310 = vmatprep.mubr.bf16.mxu0 0
    %311 = vmatmul.mubr.bf16.gmra.mrb[0].mxu0 %v173
    %v312 = vpop.f32.mrb[0].mxu0
    %v313 = vadd.f32 %v63, %v312
    %v314 = vpop.f32.mrb[0].mxu0
    %v315 = vadd.f32 %v67, %v314
    %v316 = vpop.f32.mrb[0].mxu0
    %v317 = vadd.f32 %v63, %v316
    %v318 = vpop.f32.mrb[0].mxu0
    %v319 = vadd.f32 %v67, %v318
    %320 = vdwg.mxu0
    %321 = vmatprep.subr.bf16.mxu0 %v143
    %322 = vmatpush1.bf16.msra.mxu0 %v142
    %323 = vmatprep.subr.bf16.mxu0 %v149
    %324 = vmatpush1.bf16.msra.mxu0 %v148
    %325 = vmatprep.subr.bf16.mxu0 0
    %326 = vmatpush1.bf16.msra.mxu0 0
    %327 = vmatprep.subr.bf16.mxu0 0
    %328 = vmatpush1.bf16.msra.mxu0 0
    %329 = vmatprep.subr.bf16.mxu0 0
    %330 = vmatpush1.bf16.msra.mxu0 0
    %331 = vmatprep.subr.bf16.mxu0 0
    %332 = vmatpush1.bf16.msra.mxu0 0
    %333 = vmatprep.subr.bf16.mxu0 0
    %334 = vmatpush1.bf16.msra.mxu0 0
    %335 = vmatprep.subr.bf16.mxu0 0
    %336 = vmatpush1.bf16.msra.mxu0 0
    %337 = vmatprep.subr.bf16.mxu0 0
    %338 = vmatpush1.bf16.msra.mxu0 0
    %339 = vmatprep.subr.bf16.mxu0 0
    %340 = vmatpush1.bf16.msra.mxu0 0
    %341 = vmatprep.subr.bf16.mxu0 0
    %342 = vmatpush1.bf16.msra.mxu0 0
    %343 = vmatprep.subr.bf16.mxu0 0
    %344 = vmatpush1.bf16.msra.mxu0 0
    %345 = vmatprep.subr.bf16.mxu0 0
    %346 = vmatpush1.bf16.msra.mxu0 0
    %347 = vmatprep.subr.bf16.mxu0 0
    %348 = vmatpush1.bf16.msra.mxu0 0
    %349 = vmatprep.subr.bf16.mxu0 0
    %350 = vmatpush1.bf16.msra.mxu0 0
    %351 = vmatprep.subr.bf16.mxu0 0
    %352 = vmatpush1.bf16.msra.mxu0 0
    %353 = vmatprep.mubr.bf16.mxu0 0
    %354 = vmatmul.mubr.bf16.gmra.mrb[0].mxu0 %v164
    %v355 = vpop.f32.mrb[0].mxu0
    %v356 = vadd.f32 %v71, %v355
    %v357 = vpop.f32.mrb[0].mxu0
    %v358 = vadd.f32 %v75, %v357
    %v359 = vpop.f32.mrb[0].mxu0
    %v360 = vadd.f32 %v71, %v359
    %v361 = vpop.f32.mrb[0].mxu0
    %v362 = vadd.f32 %v75, %v361
    %363 = vmatprep.mubr.bf16.mxu0 0
    %364 = vmatmul.mubr.bf16.gmra.mrb[0].mxu0 %v167
    %v365 = vpop.f32.mrb[0].mxu0
    %v366 = vadd.f32 %v71, %v365
    %v367 = vpop.f32.mrb[0].mxu0
    %v368 = vadd.f32 %v75, %v367
    %v369 = vpop.f32.mrb[0].mxu0
    %v370 = vadd.f32 %v71, %v369
    %v371 = vpop.f32.mrb[0].mxu0
    %v372 = vadd.f32 %v75, %v371
    %373 = vmatprep.mubr.bf16.mxu0 0
    %374 = vmatmul.mubr.bf16.gmra.mrb[0].mxu0 %v170
    %v375 = vpop.f32.mrb[0].mxu0
    %v376 = vadd.f32 %v71, %v375
    %v377 = vpop.f32.mrb[0].mxu0
    %v378 = vadd.f32 %v75, %v377
    %v379 = vpop.f32.mrb[0].mxu0
    %v380 = vadd.f32 %v71, %v379
    %v381 = vpop.f32.mrb[0].mxu0
    %v382 = vadd.f32 %v75, %v381
    %383 = vmatprep.mubr.bf16.mxu0 0
    %384 = vmatmul.mubr.bf16.gmra.mrb[0].mxu0 %v173
    %v385 = vpop.f32.mrb[0].mxu0
    %v386 = vadd.f32 %v71, %v385
    %v387 = vpop.f32.mrb[0].mxu0
    %v388 = vadd.f32 %v75, %v387
    %v389 = vpop.f32.mrb[0].mxu0
    %v390 = vadd.f32 %v71, %v389
    %v391 = vpop.f32.mrb[0].mxu0
    %v392 = vadd.f32 %v75, %v391
    %393 = vdwg.mxu0
    %v394 = vpack.c.bf16 %v214, %v210
    %v395 = vpack.c.bf16 %v216, %v212
    %v396 = vpack.c.bf16 %v287, %v283
    %v397 = vpack.c.bf16 %v289, %v285
    %v398 = vpack.c.bf16 %v360, %v356
    %v399 = vpack.c.bf16 %v362, %v358
    %v400 = vpack.c.bf16 %v224, %v220
    %v401 = vpack.c.bf16 %v226, %v222
    %v402 = vpack.c.bf16 %v297, %v293
    %v403 = vpack.c.bf16 %v299, %v295
    %v404 = vpack.c.bf16 %v370, %v366
    %v405 = vpack.c.bf16 %v372, %v368
    %v406 = vpack.c.bf16 %v234, %v230
    %v407 = vpack.c.bf16 %v236, %v232
    %v408 = vpack.c.bf16 %v307, %v303
    %v409 = vpack.c.bf16 %v309, %v305
    %v410 = vpack.c.bf16 %v380, %v376
    %v411 = vpack.c.bf16 %v382, %v378
    %v412 = vpack.c.bf16 %v244, %v240
    %v413 = vpack.c.bf16 %v246, %v242
    %v414 = vpack.c.bf16 %v317, %v313
    %v415 = vpack.c.bf16 %v319, %v315
    %v416 = vpack.c.bf16 %v390, %v386
    %v417 = vpack.c.bf16 %v392, %v388
    %v442 = vunpack.c.l.b16 %v394
    %v443 = vunpack.c.l.b16 %v395
    %v444 = vunpack.c.l.b16 %v396
    %v445 = vunpack.c.l.b16 %v397
    %v446 = vunpack.c.l.b16 %v398
    %v447 = vunpack.c.l.b16 %v399
    %v448 = vunpack.c.h.b16 %v394
    %v449 = vunpack.c.h.b16 %v395
    %v450 = vunpack.c.h.b16 %v396
    %v451 = vunpack.c.h.b16 %v397
    %v452 = vunpack.c.h.b16 %v398
    %v453 = vunpack.c.h.b16 %v399
    %v454 = vunpack.c.l.b16 %v400
    %v455 = vunpack.c.l.b16 %v401
    %v456 = vunpack.c.l.b16 %v402
    %v457 = vunpack.c.l.b16 %v403
    %v458 = vunpack.c.l.b16 %v404
    %v459 = vunpack.c.l.b16 %v405
    %v460 = vunpack.c.h.b16 %v400
    %v461 = vunpack.c.h.b16 %v401
    %v462 = vunpack.c.h.b16 %v402
    %v463 = vunpack.c.h.b16 %v403
    %v464 = vunpack.c.h.b16 %v404
    %v465 = vunpack.c.h.b16 %v405
    %v466 = vunpack.c.l.b16 %v406
    %v467 = vunpack.c.l.b16 %v407
    %v468 = vunpack.c.l.b16 %v408
    %v469 = vunpack.c.l.b16 %v409
    %v470 = vunpack.c.l.b16 %v410
    %v471 = vunpack.c.l.b16 %v411
    %v472 = vunpack.c.h.b16 %v406
    %v473 = vunpack.c.h.b16 %v407
    %v474 = vunpack.c.h.b16 %v408
    %v475 = vunpack.c.h.b16 %v409
    %v476 = vunpack.c.h.b16 %v410
    %v477 = vunpack.c.h.b16 %v411
    %v478 = vunpack.c.l.b16 %v412
    %v479 = vunpack.c.l.b16 %v413
    %v480 = vunpack.c.l.b16 %v414
    %v481 = vunpack.c.l.b16 %v415
    %v482 = vunpack.c.l.b16 %v416
    %v483 = vunpack.c.l.b16 %v417
    %v484 = vunpack.c.h.b16 %v412
    %v485 = vunpack.c.h.b16 %v413
    %v486 = vunpack.c.h.b16 %v414
    %v487 = vunpack.c.h.b16 %v415
    %v488 = vunpack.c.h.b16 %v416
    %v489 = vunpack.c.h.b16 %v417
    %v490 = vpack.c.b16 %v443, %v442
    %v491 = vpack.c.b16 %v445, %v444
    %v492 = vpack.c.b16 %v447, %v446
    %v493 = vpack.c.b16 %v449, %v448
    %v494 = vpack.c.b16 %v451, %v450
    %v495 = vpack.c.b16 %v453, %v452
    %v496 = vpack.c.b16 %v455, %v454
    %v497 = vpack.c.b16 %v457, %v456
    %v498 = vpack.c.b16 %v459, %v458
    %v499 = vpack.c.b16 %v461, %v460
    %v500 = vpack.c.b16 %v463, %v462
    %v501 = vpack.c.b16 %v465, %v464
    %v502 = vpack.c.b16 %v467, %v466
    %v503 = vpack.c.b16 %v469, %v468
    %v504 = vpack.c.b16 %v471, %v470
    %v505 = vpack.c.b16 %v473, %v472
    %v506 = vpack.c.b16 %v475, %v474
    %v507 = vpack.c.b16 %v477, %v476
    %v508 = vpack.c.b16 %v479, %v478
    %v509 = vpack.c.b16 %v481, %v480
    %v510 = vpack.c.b16 %v483, %v482
    %v511 = vpack.c.b16 %v485, %v484
    %v512 = vpack.c.b16 %v487, %v486
    %v513 = vpack.c.b16 %v489, %v488
    %538 = vst [vmem:[#allocation5] sm:$0xff] %v490
    %539 = vst [vmem:[#allocation5 + $0x8] sm:$0xff] %v491
    %540 = vst [vmem:[#allocation5 + $0x10] sm:$0xff] %v492
    %541 = vst [vmem:[#allocation5 + $0x18] sm:$0xff] %v493
    %542 = vst [vmem:[#allocation5 + $0x20] sm:$0xff] %v494
    %543 = vst [vmem:[#allocation5 + $0x28] sm:$0xff] %v495
    %544 = vst [vmem:[#allocation5 + $0x30] sm:$0xff] %v496
    %545 = vst [vmem:[#allocation5 + $0x38] sm:$0xff] %v497
    %546 = vst [vmem:[#allocation5 + $0x40] sm:$0xff] %v498
    %547 = vst [vmem:[#allocation5 + $0x48] sm:$0xff] %v499
    %548 = vst [vmem:[#allocation5 + $0x50] sm:$0xff] %v500
    %549 = vst [vmem:[#allocation5 + $0x58] sm:$0xff] %v501
    %550 = vst [vmem:[#allocation5 + $0x60] sm:$0xff] %v502
    %551 = vst [vmem:[#allocation5 + $0x68] sm:$0xff] %v503
    %552 = vst [vmem:[#allocation5 + $0x70] sm:$0xff] %v504
    %553 = vst [vmem:[#allocation5 + $0x78] sm:$0xff] %v505
    %554 = vst [vmem:[#allocation5 + $0x80] sm:$0xff] %v506
    %555 = vst [vmem:[#allocation5 + $0x88] sm:$0xff] %v507
    %556 = vst [vmem:[#allocation5 + $0x90] sm:$0xff] %v508
    %557 = vst [vmem:[#allocation5 + $0x98] sm:$0xff] %v509
    %558 = vst [vmem:[#allocation5 + $0xa0] sm:$0xff] %v510
    %559 = vst [vmem:[#allocation5 + $0xa8] sm:$0xff] %v511
    %560 = vst [vmem:[#allocation5 + $0xb0] sm:$0xff] %v512
    %561 = vst [vmem:[#allocation5 + $0xb8] sm:$0xff] %v513
    // Predicated region
    $region18: #{tpu_custom_call.1} parent=1 // pred_check
      _
    $region19: #{tpu_custom_call.1} parent=1 // pred_check_branch
      %563 = sbr.rel (0) target = $region21
    $region20: #{tpu_custom_call.1} parent=1 // pred_region
      %s565 = ssub.s32 3072, 3072
      %566 = vsyncadd [#allocation4], %s565
      %s567 = sshll.u32 [#allocation5], 4
      %s568 = int_to_ptr.vmem [resolvable:$true] %s567
      %573 = dma.vmem_to_hbm [thread:$0]  %s568, 3072, %s3, [#allocation4], 384, 384, 24
    $region21: #{tpu_custom_call.1} parent=1 // pred_fallthru
      _
    // Predicated region
    $region22: #{tpu_custom_call.1} parent=1 // pred_check
      _
    $region23: #{tpu_custom_call.1} parent=1 // pred_check_branch
      %575 = sbr.rel (0) target = $region25
    $region24: #{tpu_custom_call.1} parent=1 // pred_region
      %576 = dma.done [#allocation4], 3072
    $region25: #{tpu_custom_call.1} parent=1 // pred_fallthru
      _
    %577 = vsyncpa [#allocation3], 1
    %578 = vsyncpa [#allocation4], 1

</llo_original>
